<compile_context>
chip_gen: v7x
topology: tpu7x:2x2x1
jax: 0.10.0
libtpu: 0.0.40
codegen_flags: <defaults>
</compile_context>

<pallas_src>
import numpy as np
import jax
import jax.numpy as jnp
from jax.experimental import pallas as pl
from jax.experimental.pallas import tpu as pltpu


def _round_up(x, m):
    return ((x + m - 1) // m) * m


# ----------------------------------------------------------------------------
# Pallas kernel: one grid step == one TM-row tile of the flattened (B*T) rows.
# Two MXU matmuls (fused-concat MLP, output projection); bias adds on the VPU
# in f32.
# ----------------------------------------------------------------------------
def _fused_mlp_kernel(
    xc_ref,     # [TM, 2C]  bf16   rows of concat([x, conditions + emb], -1)
    wcat_ref,   # [2C, C]   bf16   mlps weight (transposed, x-rows stacked over cond-rows)
    bm_ref,     # [1, C]    f32    mlps bias
    wo_ref,     # [C, Fp]   bf16   output_process weight (transposed, lane-padded)
    bo_ref,     # [1, Fp]   f32    output_process bias (lane-padded)
    out_ref,    # [TM, Fp]  f32
):
    f32 = jnp.float32

    # --- mlps(cat([x, cond], -1)): single K=2C MXU chain, f32 accumulation ---
    h = jnp.dot(xc_ref[...], wcat_ref[...], preferred_element_type=f32)   # [TM, C] f32
    h = h + bm_ref[...]                                                   # f32 VPU add

    # --- output_process: Linear(C -> F); cast accumulator to bf16 for the MXU ---
    out = jnp.dot(h.astype(wo_ref.dtype), wo_ref[...],
                  preferred_element_type=f32)                             # [TM, Fp] f32
    out_ref[...] = (out + bo_ref[...]).astype(out_ref.dtype)


def _build_pallas_call(R_pad, TM, C, F_pad, weight_buffer_count):
    """Construct the pallas_call for given padded shapes / tiling."""
    rep2 = lambda i: (0, 0)
    if weight_buffer_count is None:
        wkw = {}
    else:
        # Grid-invariant operands: a single buffer is enough (block never changes).
        wkw = dict(pipeline_mode=pl.Buffered(weight_buffer_count))

    return pl.pallas_call(
        _fused_mlp_kernel,
        out_shape=jax.ShapeDtypeStruct((R_pad, F_pad), jnp.float32),
        grid_spec=pltpu.PrefetchScalarGridSpec(
            num_scalar_prefetch=0,
            grid=(R_pad // TM,),
            in_specs=[
                pl.BlockSpec((TM, 2 * C), lambda i: (i, 0)),        # xc row tile
                pl.BlockSpec((2 * C, C), rep2, **wkw),              # wcat
                pl.BlockSpec((1, C), rep2, **wkw),                  # bm
                pl.BlockSpec((C, F_pad), rep2, **wkw),              # wo (lane-padded)
                pl.BlockSpec((1, F_pad), rep2, **wkw),              # bo (lane-padded)
            ],
            out_specs=pl.BlockSpec((TM, F_pad), lambda i: (i, 0)),
        ),
        compiler_params=pltpu.CompilerParams(
            # Row-tile axis is fully parallel -> shards across v7x's 2 TensorCores.
            dimension_semantics=("parallel",),
            # Explicit scoped-VMEM budget (safe on v5e/v6e/v7x); tile sizes below
            # are chosen to fit comfortably under it even at latent_dim ~ 1024.
            vmem_limit_bytes=32 * 1024 * 1024,
        ),
    )


def ar_diff_dec_forward(x, timesteps, conditions, params, pe_table, *, tm_target=256):
    """x: [B,T,C] f32, timesteps: [B] i32, conditions: [B,T,C] f32 -> [B,T,F] f32."""
    B, T, C = x.shape
    F = params["wo"].shape[1]

    # --- TimestepEmbedder hoisted out of the kernel (M=1 matmuls; leave to XLA) ---
    pe_t = pe_table[timesteps]                                      # [B, 1, C]
    h1 = pe_t @ params["w1"] + params["b1"]
    h1 = h1 * jax.nn.sigmoid(h1)                                    # SiLU
    emb = h1 @ params["w2"] + params["b2"]                          # [B, 1, C]
    cond = conditions + emb                                         # [B, T, C]

    # --- flatten (B, T) into rows; stack features so the kernel does one K=2C dot ---
    xc = jnp.concatenate([x, cond], axis=-1).reshape(B * T, 2 * C)  # [R, 2C]

    R = B * T
    # Row tile: 256 on v6e/v7x-class parts (use tm_target=128 on v5e); clamp for
    # tiny problems while keeping the sublane (8) alignment constraint.
    TM = min(tm_target, _round_up(R, 8))
    R_pad = _round_up(R, TM)
    if R_pad != R:
        xc = jnp.pad(xc, ((0, R_pad - R), (0, 0)))

    # --- lane-dense output: pad F up to a multiple of 128, slice after the call ---
    F_pad = _round_up(F, 128)
    wo, bo = params["wo"], params["bo"]
    if F_pad != F:
        wo = jnp.pad(wo, ((0, 0), (0, F_pad - F)))
        bo = jnp.pad(bo, ((0, 0), (0, F_pad - F)))

    # mlps weight for the fused concat-matmul: rows multiplying x stacked over
    # rows multiplying cond  (== torch mlps.weight.T).
    wcat = jnp.concatenate([params["wmx"], params["wmc"]], axis=0)  # [2C, C]

    # bf16 matmul operands; biases / accumulation stay f32.
    xc_b = xc.astype(jnp.bfloat16)
    wcat_b = wcat.astype(jnp.bfloat16)
    wo_b = wo.astype(jnp.bfloat16)
    bm_f = params["bm"].astype(jnp.float32)
    bo_f = bo.astype(jnp.float32)

    args = (xc_b, wcat_b, bm_f, wo_b, bo_f)
    try:
        out = _build_pallas_call(R_pad, TM, C, F_pad, weight_buffer_count=1)(*args)
    except Exception:
        # Fallback: default double-buffering if Buffered(1) pipeline mode is
        # unsupported by the installed JAX/Mosaic version.
        out = _build_pallas_call(R_pad, TM, C, F_pad, weight_buffer_count=None)(*args)

    return out[:R, :F].reshape(B, T, F)


# ----------------------------------------------------------------------------
# Parameter / buffer construction (deterministic, synthetic)
# ----------------------------------------------------------------------------
def make_positional_encoding(d_model, max_len):
    pe = np.zeros((max_len, d_model), dtype=np.float32)
    position = np.arange(0, max_len, dtype=np.float32)[:, None]
    div_term = np.exp(np.arange(0, d_model, 2, dtype=np.float32)
                      * (-np.log(10000.0) / d_model))
    pe[:, 0::2] = np.sin(position * div_term)
    pe[:, 1::2] = np.cos(position * div_term)
    pe = pe[:, None, :]                          # [max_len, 1, d_model]
    return jnp.asarray(pe)


def make_params(key, latent_dim, input_feats):
    C, F = latent_dim, input_feats
    ks = jax.random.split(key, 12)
    s = 0.05
    # weights stored as [in, out] (transpose of torch nn.Linear.weight)
    return {
        "w1":  s * jax.random.normal(ks[0], (C, C), jnp.float32),
        "b1":  s * jax.random.normal(ks[1], (1, C), jnp.float32),
        "w2":  s * jax.random.normal(ks[2], (C, C), jnp.float32),
        "b2":  s * jax.random.normal(ks[3], (1, C), jnp.float32),
        "wmx": s * jax.random.normal(ks[4], (C, C), jnp.float32),   # mlps W^T[:C]
        "wmc": s * jax.random.normal(ks[5], (C, C), jnp.float32),   # mlps W^T[C:]
        "bm":  s * jax.random.normal(ks[6], (1, C), jnp.float32),
        "wo":  s * jax.random.normal(ks[7], (C, F), jnp.float32),
        "bo":  s * jax.random.normal(ks[8], (1, F), jnp.float32),
    }


def reference_forward(x, timesteps, conditions, params, pe_table):
    """Pure-JAX f32 reference mirroring the PyTorch forward()."""
    pe_t = pe_table[timesteps]                                      # [B,1,C]
    h1 = pe_t @ params["w1"] + params["b1"]
    h1 = h1 * jax.nn.sigmoid(h1)
    emb = h1 @ params["w2"] + params["b2"]                          # [B,1,C]
    cond = conditions + emb
    cat = jnp.concatenate([x, cond], axis=-1)                       # [B,T,2C]
    wm = jnp.concatenate([params["wmx"], params["wmc"]], axis=0)    # [2C,C]
    h = cat @ wm + params["bm"]
    return h @ params["wo"] + params["bo"]


if __name__ == "__main__":
    # Small synthetic config consistent with the module's forward():
    #   x:          [B, T, latent_dim]
    #   timesteps:  [B] int
    #   conditions: [B, T, latent_dim]   (as produced by conditon_forward)
    B, T = 2, 8
    latent_dim = 32
    input_feats = 16
    max_len = 64

    key = jax.random.PRNGKey(0)
    k_x, k_c, k_t, k_p = jax.random.split(key, 4)

    x = jax.random.normal(k_x, (B, T, latent_dim), jnp.float32)
    conditions = jax.random.normal(k_c, (B, T, latent_dim), jnp.float32)
    timesteps = jax.random.randint(k_t, (B,), 0, max_len, jnp.int32)

    params = make_params(k_p, latent_dim, input_feats)
    pe_table = make_positional_encoding(latent_dim, max_len)

    out = ar_diff_dec_forward(x, timesteps, conditions, params, pe_table)
    out = jax.block_until_ready(out)

    ref = reference_forward(x, timesteps, conditions, params, pe_table)
    # bf16 MXU operands (f32 accumulation) -> loosened tolerance vs. the f32 reference.
    np.testing.assert_allclose(np.asarray(out), np.asarray(ref),
                               rtol=3e-2, atol=3e-2)
    assert out.shape == (B, T, input_feats)
    print("KERNEL_OK")
</pallas_src>

<mosaic_0001>
module attributes {stable_mosaic.version = 11 : i64} {
  func.func @_fused_mlp_kernel(%arg0: i32, %arg1: memref<16x64xbf16, #tpu.memory_space<vmem>>, %arg2: memref<64x32xbf16, #tpu.memory_space<vmem>>, %arg3: memref<1x32xf32, #tpu.memory_space<vmem>>, %arg4: memref<32x128xbf16, #tpu.memory_space<vmem>>, %arg5: memref<1x128xf32, #tpu.memory_space<vmem>>, %arg6: memref<16x128xf32, #tpu.memory_space<vmem>>) attributes {dimension_semantics = [#tpu.dimension_semantics<parallel>], iteration_bounds = array<i64: 1>, scalar_prefetch = 0 : i64, scratch_operands = 0 : i64, tpu.core_type = #tpu.core_type<tc>, window_params = [{transform_indices = @transform_0, window_bounds = array<i64: 16, 64>}, {pipeline_mode = #tpu.pipeline_mode<synchronous>, transform_indices = @transform_1, window_bounds = array<i64: 64, 32>}, {pipeline_mode = #tpu.pipeline_mode<synchronous>, transform_indices = @transform_2, window_bounds = array<i64: 1, 32>}, {pipeline_mode = #tpu.pipeline_mode<synchronous>, transform_indices = @transform_3, window_bounds = array<i64: 32, 128>}, {pipeline_mode = #tpu.pipeline_mode<synchronous>, transform_indices = @transform_4, window_bounds = array<i64: 1, 128>}, {transform_indices = @transform_5, window_bounds = array<i64: 16, 128>}]} {
    %c0 = arith.constant 0 : index
    %c0_0 = arith.constant 0 : index
    %0 = vector.load %arg1[%c0, %c0_0] : memref<16x64xbf16, #tpu.memory_space<vmem>>, vector<16x64xbf16>
    %c0_1 = arith.constant 0 : index
    %c0_2 = arith.constant 0 : index
    %1 = vector.load %arg2[%c0_1, %c0_2] : memref<64x32xbf16, #tpu.memory_space<vmem>>, vector<64x32xbf16>
    %cst = arith.constant dense<0.000000e+00> : vector<16x32xf32>
    %2 = tpu.matmul %0, %1, %cst {dimension_numbers = #tpu.dot_dimension_numbers<[1], [0], [0], [1], [0, 0, 1, 1], [], []>} : vector<16x64xbf16>, vector<64x32xbf16>, vector<16x32xf32> -> vector<16x32xf32>
    %c0_3 = arith.constant 0 : index
    %c0_4 = arith.constant 0 : index
    %3 = vector.load %arg3[%c0_3, %c0_4] : memref<1x32xf32, #tpu.memory_space<vmem>>, vector<1x32xf32>
    %4 = vector.broadcast %3 : vector<1x32xf32> to vector<16x32xf32>
    %5 = arith.addf %2, %4 : vector<16x32xf32>
    %6 = arith.truncf %5 : vector<16x32xf32> to vector<16x32xbf16>
    %c0_5 = arith.constant 0 : index
    %c0_6 = arith.constant 0 : index
    %7 = vector.load %arg4[%c0_5, %c0_6] : memref<32x128xbf16, #tpu.memory_space<vmem>>, vector<32x128xbf16>
    %cst_7 = arith.constant dense<0.000000e+00> : vector<16x128xf32>
    %8 = tpu.matmul %6, %7, %cst_7 {dimension_numbers = #tpu.dot_dimension_numbers<[1], [0], [0], [1], [0, 0, 1, 1], [], []>} : vector<16x32xbf16>, vector<32x128xbf16>, vector<16x128xf32> -> vector<16x128xf32>
    %c0_8 = arith.constant 0 : index
    %c0_9 = arith.constant 0 : index
    %9 = vector.load %arg5[%c0_8, %c0_9] : memref<1x128xf32, #tpu.memory_space<vmem>>, vector<1x128xf32>
    %10 = vector.broadcast %9 : vector<1x128xf32> to vector<16x128xf32>
    %11 = arith.addf %8, %10 : vector<16x128xf32>
    %c0_10 = arith.constant 0 : index
    %c0_11 = arith.constant 0 : index
    %12 = vector.load %arg6[%c0_10, %c0_11] : memref<16x128xf32, #tpu.memory_space<vmem>>, vector<16x128xf32>
    tpu.vector_store %arg6[%c0_10, %c0_11], %11 {strides = array<i32>} : memref<16x128xf32, #tpu.memory_space<vmem>>, vector<16x128xf32>,
    return
  }
  func.func @transform_0(%arg0: i32) -> (i32, i32) {
    %c0_i32 = arith.constant 0 : i32
    %c0_i32_0 = arith.constant 0 : i32
    return %arg0, %c0_i32 : i32, i32
  }
  func.func @transform_1(%arg0: i32) -> (i32, i32) {
    %c0_i32 = arith.constant 0 : i32
    %c0_i32_0 = arith.constant 0 : i32
    %c0_i32_1 = arith.constant 0 : i32
    return %c0_i32, %c0_i32_0 : i32, i32
  }
  func.func @transform_2(%arg0: i32) -> (i32, i32) {
    %c0_i32 = arith.constant 0 : i32
    %c0_i32_0 = arith.constant 0 : i32
    %c0_i32_1 = arith.constant 0 : i32
    return %c0_i32, %c0_i32_0 : i32, i32
  }
  func.func @transform_3(%arg0: i32) -> (i32, i32) {
    %c0_i32 = arith.constant 0 : i32
    %c0_i32_0 = arith.constant 0 : i32
    %c0_i32_1 = arith.constant 0 : i32
    return %c0_i32, %c0_i32_0 : i32, i32
  }
  func.func @transform_4(%arg0: i32) -> (i32, i32) {
    %c0_i32 = arith.constant 0 : i32
    %c0_i32_0 = arith.constant 0 : i32
    %c0_i32_1 = arith.constant 0 : i32
    return %c0_i32, %c0_i32_0 : i32, i32
  }
  func.func @transform_5(%arg0: i32) -> (i32, i32) {
    %c0_i32 = arith.constant 0 : i32
    %c0_i32_0 = arith.constant 0 : i32
    return %arg0, %c0_i32 : i32, i32
  }
}

module attributes {stable_mosaic.version = 11 : i64} {
  func.func @_fused_mlp_kernel(%arg0: i32, %arg1: memref<16x64xbf16, #tpu.memory_space<vmem>>, %arg2: memref<64x32xbf16, #tpu.memory_space<vmem>>, %arg3: memref<1x32xf32, #tpu.memory_space<vmem>>, %arg4: memref<32x128xbf16, #tpu.memory_space<vmem>>, %arg5: memref<1x128xf32, #tpu.memory_space<vmem>>, %arg6: memref<16x128xf32, #tpu.memory_space<vmem>>) attributes {dimension_semantics = [#tpu.dimension_semantics<parallel>], iteration_bounds = array<i64: 1>, scalar_prefetch = 0 : i64, scratch_operands = 0 : i64, tpu.core_type = #tpu.core_type<tc>, window_params = [{transform_indices = @transform_0, window_bounds = array<i64: 16, 64>}, {pipeline_mode = #tpu.pipeline_mode<synchronous>, transform_indices = @transform_1, window_bounds = array<i64: 64, 32>}, {pipeline_mode = #tpu.pipeline_mode<synchronous>, transform_indices = @transform_2, window_bounds = array<i64: 1, 32>}, {pipeline_mode = #tpu.pipeline_mode<synchronous>, transform_indices = @transform_3, window_bounds = array<i64: 32, 128>}, {pipeline_mode = #tpu.pipeline_mode<synchronous>, transform_indices = @transform_4, window_bounds = array<i64: 1, 128>}, {transform_indices = @transform_5, window_bounds = array<i64: 16, 128>}]} {
    %c0 = arith.constant 0 : index
    %c0_0 = arith.constant 0 : index
    %0 = vector.load %arg1[%c0, %c0_0] : memref<16x64xbf16, #tpu.memory_space<vmem>>, vector<16x64xbf16>
    %c0_1 = arith.constant 0 : index
    %c0_2 = arith.constant 0 : index
    %1 = vector.load %arg2[%c0_1, %c0_2] : memref<64x32xbf16, #tpu.memory_space<vmem>>, vector<64x32xbf16>
    %cst = arith.constant dense<0.000000e+00> : vector<16x32xf32>
    %2 = tpu.matmul %0, %1, %cst {dimension_numbers = #tpu.dot_dimension_numbers<[1], [0], [0], [1], [0, 0, 1, 1], [], []>} : vector<16x64xbf16>, vector<64x32xbf16>, vector<16x32xf32> -> vector<16x32xf32>
    %c0_3 = arith.constant 0 : index
    %c0_4 = arith.constant 0 : index
    %3 = vector.load %arg3[%c0_3, %c0_4] : memref<1x32xf32, #tpu.memory_space<vmem>>, vector<1x32xf32>
    %4 = vector.broadcast %3 : vector<1x32xf32> to vector<16x32xf32>
    %5 = arith.addf %2, %4 : vector<16x32xf32>
    %6 = arith.truncf %5 : vector<16x32xf32> to vector<16x32xbf16>
    %c0_5 = arith.constant 0 : index
    %c0_6 = arith.constant 0 : index
    %7 = vector.load %arg4[%c0_5, %c0_6] : memref<32x128xbf16, #tpu.memory_space<vmem>>, vector<32x128xbf16>
    %cst_7 = arith.constant dense<0.000000e+00> : vector<16x128xf32>
    %8 = tpu.matmul %6, %7, %cst_7 {dimension_numbers = #tpu.dot_dimension_numbers<[1], [0], [0], [1], [0, 0, 1, 1], [], []>} : vector<16x32xbf16>, vector<32x128xbf16>, vector<16x128xf32> -> vector<16x128xf32>
    %c0_8 = arith.constant 0 : index
    %c0_9 = arith.constant 0 : index
    %9 = vector.load %arg5[%c0_8, %c0_9] : memref<1x128xf32, #tpu.memory_space<vmem>>, vector<1x128xf32>
    %10 = vector.broadcast %9 : vector<1x128xf32> to vector<16x128xf32>
    %11 = arith.addf %8, %10 : vector<16x128xf32>
    %c0_10 = arith.constant 0 : index
    %c0_11 = arith.constant 0 : index
    %12 = vector.load %arg6[%c0_10, %c0_11] : memref<16x128xf32, #tpu.memory_space<vmem>>, vector<16x128xf32>
    tpu.vector_store %arg6[%c0_10, %c0_11], %11 {strides = array<i32>} : memref<16x128xf32, #tpu.memory_space<vmem>>, vector<16x128xf32>,
    return
  }
  func.func @transform_0(%arg0: i32) -> (i32, i32) {
    %c0_i32 = arith.constant 0 : i32
    %c0_i32_0 = arith.constant 0 : i32
    return %arg0, %c0_i32 : i32, i32
  }
  func.func @transform_1(%arg0: i32) -> (i32, i32) {
    %c0_i32 = arith.constant 0 : i32
    %c0_i32_0 = arith.constant 0 : i32
    %c0_i32_1 = arith.constant 0 : i32
    return %c0_i32, %c0_i32_0 : i32, i32
  }
  func.func @transform_2(%arg0: i32) -> (i32, i32) {
    %c0_i32 = arith.constant 0 : i32
    %c0_i32_0 = arith.constant 0 : i32
    %c0_i32_1 = arith.constant 0 : i32
    return %c0_i32, %c0_i32_0 : i32, i32
  }
  func.func @transform_3(%arg0: i32) -> (i32, i32) {
    %c0_i32 = arith.constant 0 : i32
    %c0_i32_0 = arith.constant 0 : i32
    %c0_i32_1 = arith.constant 0 : i32
    return %c0_i32, %c0_i32_0 : i32, i32
  }
  func.func @transform_4(%arg0: i32) -> (i32, i32) {
    %c0_i32 = arith.constant 0 : i32
    %c0_i32_0 = arith.constant 0 : i32
    %c0_i32_1 = arith.constant 0 : i32
    return %c0_i32, %c0_i32_0 : i32, i32
  }
  func.func @transform_5(%arg0: i32) -> (i32, i32) {
    %c0_i32 = arith.constant 0 : i32
    %c0_i32_0 = arith.constant 0 : i32
    return %arg0, %c0_i32 : i32, i32
  }
}

</mosaic_0001>

<llo_original>
// kernel: tpu_custom_call.1
$region0: #{tpu_custom_call.1}
  #allocation0 [shape = 'u32[]', space=smem, size = 0x4, offset = 0x4, fixed_abs, tag = 'smem constant byte address 0x4 - core index']
  #allocation1 [shape = 'u32[144,128]{1,0:T(1,128)}', space=vmem, size = 0x12000, scoped, tag = 'internal scratch']
  %s0 = inlined_call_operand.vmem [shape: bf16[16,64], index: 0, kind: input, shape index: {}]
  %s1 = inlined_call_operand.vmem [shape: bf16[64,32], index: 1, kind: input, shape index: {}]
  %s2 = inlined_call_operand.vmem [shape: f32[1,32], index: 2, kind: input, shape index: {}]
  %s3 = inlined_call_operand.vmem [shape: bf16[32,128], index: 3, kind: input, shape index: {}]
  %s4 = inlined_call_operand.vmem [shape: f32[1,128], index: 4, kind: input, shape index: {}]
  %s5 = inlined_call_operand.hbm [shape: f32[16,128], index: 5, kind: output, shape index: {}]
  %s6 = sld [smem:[#allocation0]]
  $region30: #{tpu_custom_call.1} parent=0
    _
  %s8 = ssub.s32 1, %s6
  %s9 = scalar_select 0, %s8, %s6
  $region1: #{tpu_custom_call.1} parent=0
    #allocation2 [shape = 'u8[8192]{0}', space=vmem, size = 0x2000, scoped, tag = 'output window, operand 0, single buffered']
    #allocation3 [shape = 's32[1]{0}', space=sflag, size = 0x4, scoped, tag = 'scoped memory for tpu_custom_call.1']
    %10 = vsyncpa [#allocation3], 0
    // Predicated region
    $region2: #{tpu_custom_call.1} parent=1 // pred_check
      _
    $region3: #{tpu_custom_call.1} parent=1 // pred_check_branch
      %12 = sbr.rel (0) target = $region5
    $region4: #{tpu_custom_call.1} parent=1 // pred_region
      _
    $region5: #{tpu_custom_call.1} parent=1 // pred_fallthru
      _
    // Predicated region
    $region6: #{tpu_custom_call.1} parent=1 // pred_check
      _
    $region7: #{tpu_custom_call.1} parent=1 // pred_check_branch
      %14 = sbr.rel (0) target = $region9
    $region8: #{tpu_custom_call.1} parent=1 // pred_region
      _
    $region9: #{tpu_custom_call.1} parent=1 // pred_fallthru
      _
    // Predicated region
    $region10: #{tpu_custom_call.1} parent=1 // pred_check
      _
    $region11: #{tpu_custom_call.1} parent=1 // pred_check_branch
      %16 = sbr.rel (0) target = $region13
    $region12: #{tpu_custom_call.1} parent=1 // pred_region
      _
    $region13: #{tpu_custom_call.1} parent=1 // pred_fallthru
      _
    // Predicated region
    $region14: #{tpu_custom_call.1} parent=1 // pred_check
      _
    $region15: #{tpu_custom_call.1} parent=1 // pred_check_branch
      %18 = sbr.rel (0) target = $region17
    $region16: #{tpu_custom_call.1} parent=1 // pred_region
      _
    $region17: #{tpu_custom_call.1} parent=1 // pred_fallthru
      _
    // Predicated region
    $region18: #{tpu_custom_call.1} parent=1 // pred_check
      _
    $region19: #{tpu_custom_call.1} parent=1 // pred_check_branch
      %20 = sbr.rel (0) target = $region21
    $region20: #{tpu_custom_call.1} parent=1 // pred_region
      _
    $region21: #{tpu_custom_call.1} parent=1 // pred_fallthru
      _
    %v22 = vld [vmem:[%s0] sm:$0xf]
    %v23 = vld [vmem:[%s0 + $0x4] sm:$0xf]
    %v24 = vld [vmem:[%s1] sm:$0xf]
    %v25 = vld [vmem:[%s1 + $0x4] sm:$0xf]
    %v26 = vld [vmem:[%s1 + $0x8] sm:$0xf]
    %v27 = vld [vmem:[%s1 + $0xc] sm:$0xf]
    %v28 = vld [vmem:[%s1 + $0x10] sm:$0xf]
    %v29 = vld [vmem:[%s1 + $0x14] sm:$0xf]
    %v30 = vld [vmem:[%s1 + $0x18] sm:$0xf]
    %v31 = vld [vmem:[%s1 + $0x1c] sm:$0xf]
    %v32 = vld [vmem:[%s2] sm:$0x1]
    %v34 = vlaneseq
    %v35 = vshrl.u32 %v34, 7
    %v36 = vsub.s32 0, %v35
    %v37 = vrot.slane %v32, %v36
    %v41 = vunpack.c.l.b16 %v22
    %v42 = vunpack.c.l.b16 %v23
    %v43 = vpack.c.b16 %v42, %v41
    %v52 = vunpack.c.l.b16 %v24
    %v53 = vunpack.c.l.b16 %v25
    %v54 = vunpack.c.l.b16 %v26
    %v55 = vunpack.c.l.b16 %v27
    %v56 = vunpack.c.l.b16 %v28
    %v57 = vunpack.c.l.b16 %v29
    %v58 = vunpack.c.l.b16 %v30
    %v59 = vunpack.c.l.b16 %v31
    %v60 = vpack.c.b16 %v53, %v52
    %v61 = vpack.c.b16 %v55, %v54
    %v62 = vpack.c.b16 %v57, %v56
    %v63 = vpack.c.b16 %v59, %v58
    %vm68 = vcmask 523264
    %v70 = vsel %vm68, %v43, 0
    %72 = vmatprep.subr.bf16.mxu0 0
    %73 = vmatpush1.bf16.msra.mxu0 %v60
    %74 = vmatprep.subr.bf16.mxu0 0
    %75 = vmatpush1.bf16.msra.mxu0 %v61
    %76 = vmatprep.subr.bf16.mxu0 0
    %77 = vmatpush1.bf16.msra.mxu0 %v62
    %78 = vmatprep.subr.bf16.mxu0 0
    %79 = vmatpush1.bf16.msra.mxu0 %v63
    %80 = vmatprep.subr.bf16.mxu0 0
    %81 = vmatpush1.bf16.msra.mxu0 0
    %82 = vmatprep.subr.bf16.mxu0 0
    %83 = vmatpush1.bf16.msra.mxu0 0
    %84 = vmatprep.subr.bf16.mxu0 0
    %85 = vmatpush1.bf16.msra.mxu0 0
    %86 = vmatprep.subr.bf16.mxu0 0
    %87 = vmatpush1.bf16.msra.mxu0 0
    %88 = vmatprep.subr.bf16.mxu0 0
    %89 = vmatpush1.bf16.msra.mxu0 0
    %90 = vmatprep.subr.bf16.mxu0 0
    %91 = vmatpush1.bf16.msra.mxu0 0
    %92 = vmatprep.subr.bf16.mxu0 0
    %93 = vmatpush1.bf16.msra.mxu0 0
    %94 = vmatprep.subr.bf16.mxu0 0
    %95 = vmatpush1.bf16.msra.mxu0 0
    %96 = vmatprep.subr.bf16.mxu0 0
    %97 = vmatpush1.bf16.msra.mxu0 0
    %98 = vmatprep.subr.bf16.mxu0 0
    %99 = vmatpush1.bf16.msra.mxu0 0
    %100 = vmatprep.subr.bf16.mxu0 0
    %101 = vmatpush1.bf16.msra.mxu0 0
    %102 = vmatprep.subr.bf16.mxu0 0
    %103 = vmatpush1.bf16.msra.mxu0 0
    %104 = vmatprep.mubr.bf16.mxu0 0
    %105 = vmatmul.mubr.bf16.gmra.mrb[0].mxu0 %v70
    %v106 = vpop.f32.mrb[0].mxu0
    %v107 = vadd.f32 %v37, %v106
    %v108 = vpop.f32.mrb[0].mxu0
    %v109 = vpop.f32.mrb[0].mxu0
    %v110 = vadd.f32 %v37, %v109
    %v111 = vpop.f32.mrb[0].mxu0
    %112 = vdwg.mxu0
    %v113 = vpack.c.bf16 %v110, %v107
    %v114 = vld [vmem:[%s3] sm:$0xf]
    %v115 = vld [vmem:[%s3 + $0x4] sm:$0xf]
    %v116 = vld [vmem:[%s3 + $0x8] sm:$0xf]
    %v117 = vld [vmem:[%s3 + $0xc] sm:$0xf]
    %v118 = vld [vmem:[%s4] sm:$0x1]
    %v120 = vlaneseq
    %v121 = vshrl.u32 %v120, 7
    %v122 = vsub.s32 0, %v121
    %v123 = vrot.slane %v118, %v122
    %v129 = vunpack.c.l.b16 %v114
    %v130 = vunpack.c.l.b16 %v115
    %v131 = vunpack.c.l.b16 %v116
    %v132 = vunpack.c.l.b16 %v117
    %v133 = vpack.c.b16 %v130, %v129
    %v134 = vpack.c.b16 %v132, %v131
    %vm137 = vcmask 261120
    %v139 = vsel %vm137, %v113, 0
    %141 = vmatprep.subr.bf16.mxu0 0
    %142 = vmatpush1.bf16.msra.mxu0 %v133
    %143 = vmatprep.subr.bf16.mxu0 0
    %144 = vmatpush1.bf16.msra.mxu0 %v134
    %145 = vmatprep.subr.bf16.mxu0 0
    %146 = vmatpush1.bf16.msra.mxu0 0
    %147 = vmatprep.subr.bf16.mxu0 0
    %148 = vmatpush1.bf16.msra.mxu0 0
    %149 = vmatprep.subr.bf16.mxu0 0
    %150 = vmatpush1.bf16.msra.mxu0 0
    %151 = vmatprep.subr.bf16.mxu0 0
    %152 = vmatpush1.bf16.msra.mxu0 0
    %153 = vmatprep.subr.bf16.mxu0 0
    %154 = vmatpush1.bf16.msra.mxu0 0
    %155 = vmatprep.subr.bf16.mxu0 0
    %156 = vmatpush1.bf16.msra.mxu0 0
    %157 = vmatprep.subr.bf16.mxu0 0
    %158 = vmatpush1.bf16.msra.mxu0 0
    %159 = vmatprep.subr.bf16.mxu0 0
    %160 = vmatpush1.bf16.msra.mxu0 0
    %161 = vmatprep.subr.bf16.mxu0 0
    %162 = vmatpush1.bf16.msra.mxu0 0
    %163 = vmatprep.subr.bf16.mxu0 0
    %164 = vmatpush1.bf16.msra.mxu0 0
    %165 = vmatprep.subr.bf16.mxu0 0
    %166 = vmatpush1.bf16.msra.mxu0 0
    %167 = vmatprep.subr.bf16.mxu0 0
    %168 = vmatpush1.bf16.msra.mxu0 0
    %169 = vmatprep.subr.bf16.mxu0 0
    %170 = vmatpush1.bf16.msra.mxu0 0
    %171 = vmatprep.subr.bf16.mxu0 0
    %172 = vmatpush1.bf16.msra.mxu0 0
    %173 = vmatprep.mubr.bf16.mxu0 0
    %174 = vmatmul.mubr.bf16.gmra.mrb[0].mxu0 %v139
    %v175 = vpop.f32.mrb[0].mxu0
    %v176 = vadd.f32 %v123, %v175
    %v177 = vpop.f32.mrb[0].mxu0
    %v178 = vpop.f32.mrb[0].mxu0
    %v179 = vadd.f32 %v123, %v178
    %v180 = vpop.f32.mrb[0].mxu0
    %181 = vdwg.mxu0
    %182 = vst [vmem:[#allocation2] sm:$0xff] %v176
    %183 = vst [vmem:[#allocation2 + $0x8] sm:$0xff] %v179
    // Predicated region
    $region22: #{tpu_custom_call.1} parent=1 // pred_check
      _
    $region23: #{tpu_custom_call.1} parent=1 // pred_check_branch
      %185 = sbr.rel (0) target = $region25
    $region24: #{tpu_custom_call.1} parent=1 // pred_region
      %s187 = ssub.s32 256, 256
      %188 = vsyncadd [#allocation3], %s187
      %s189 = sshll.u32 [#allocation2], 4
      %s190 = int_to_ptr.vmem [resolvable:$true] %s189
      %195 = dma.vmem_to_hbm [thread:$0]  %s190, 256, %s5, [#allocation3], 128, 128, 8
    $region25: #{tpu_custom_call.1} parent=1 // pred_fallthru
      _
    // Predicated region
    $region26: #{tpu_custom_call.1} parent=1 // pred_check
      _
    $region27: #{tpu_custom_call.1} parent=1 // pred_check_branch
      %197 = sbr.rel (0) target = $region29
    $region28: #{tpu_custom_call.1} parent=1 // pred_region
      %198 = dma.done [#allocation3], 256
    $region29: #{tpu_custom_call.1} parent=1 // pred_fallthru
      _
    %199 = vsyncpa [#allocation3], 1

// kernel: tpu_custom_call.1
$region0: #{tpu_custom_call.1}
  #allocation0 [shape = 'u32[]', space=smem, size = 0x4, offset = 0x4, fixed_abs, tag = 'smem constant byte address 0x4 - core index']
  #allocation1 [shape = 'u32[144,128]{1,0:T(1,128)}', space=vmem, size = 0x12000, scoped, tag = 'internal scratch']
  %s0 = inlined_call_operand.vmem [shape: bf16[16,64], index: 0, kind: input, shape index: {}]
  %s1 = inlined_call_operand.vmem [shape: bf16[64,32], index: 1, kind: input, shape index: {}]
  %s2 = inlined_call_operand.vmem [shape: f32[1,32], index: 2, kind: input, shape index: {}]
  %s3 = inlined_call_operand.vmem [shape: bf16[32,128], index: 3, kind: input, shape index: {}]
  %s4 = inlined_call_operand.vmem [shape: f32[1,128], index: 4, kind: input, shape index: {}]
  %s5 = inlined_call_operand.hbm [shape: f32[16,128], index: 5, kind: output, shape index: {}]
  %s6 = sld [smem:[#allocation0]]
  $region30: #{tpu_custom_call.1} parent=0
    _
  %s8 = ssub.s32 1, %s6
  %s9 = scalar_select 0, %s8, %s6
  $region1: #{tpu_custom_call.1} parent=0
    #allocation2 [shape = 'u8[8192]{0}', space=vmem, size = 0x2000, scoped, tag = 'output window, operand 0, single buffered']
    #allocation3 [shape = 's32[1]{0}', space=sflag, size = 0x4, scoped, tag = 'scoped memory for tpu_custom_call.1']
    %10 = vsyncpa [#allocation3], 0
    // Predicated region
    $region2: #{tpu_custom_call.1} parent=1 // pred_check
      _
    $region3: #{tpu_custom_call.1} parent=1 // pred_check_branch
      %12 = sbr.rel (0) target = $region5
    $region4: #{tpu_custom_call.1} parent=1 // pred_region
      _
    $region5: #{tpu_custom_call.1} parent=1 // pred_fallthru
      _
    // Predicated region
    $region6: #{tpu_custom_call.1} parent=1 // pred_check
      _
    $region7: #{tpu_custom_call.1} parent=1 // pred_check_branch
      %14 = sbr.rel (0) target = $region9
    $region8: #{tpu_custom_call.1} parent=1 // pred_region
      _
    $region9: #{tpu_custom_call.1} parent=1 // pred_fallthru
      _
    // Predicated region
    $region10: #{tpu_custom_call.1} parent=1 // pred_check
      _
    $region11: #{tpu_custom_call.1} parent=1 // pred_check_branch
      %16 = sbr.rel (0) target = $region13
    $region12: #{tpu_custom_call.1} parent=1 // pred_region
      _
    $region13: #{tpu_custom_call.1} parent=1 // pred_fallthru
      _
    // Predicated region
    $region14: #{tpu_custom_call.1} parent=1 // pred_check
      _
    $region15: #{tpu_custom_call.1} parent=1 // pred_check_branch
      %18 = sbr.rel (0) target = $region17
    $region16: #{tpu_custom_call.1} parent=1 // pred_region
      _
    $region17: #{tpu_custom_call.1} parent=1 // pred_fallthru
      _
    // Predicated region
    $region18: #{tpu_custom_call.1} parent=1 // pred_check
      _
    $region19: #{tpu_custom_call.1} parent=1 // pred_check_branch
      %20 = sbr.rel (0) target = $region21
    $region20: #{tpu_custom_call.1} parent=1 // pred_region
      _
    $region21: #{tpu_custom_call.1} parent=1 // pred_fallthru
      _
    %v22 = vld [vmem:[%s0] sm:$0xf]
    %v23 = vld [vmem:[%s0 + $0x4] sm:$0xf]
    %v24 = vld [vmem:[%s1] sm:$0xf]
    %v25 = vld [vmem:[%s1 + $0x4] sm:$0xf]
    %v26 = vld [vmem:[%s1 + $0x8] sm:$0xf]
    %v27 = vld [vmem:[%s1 + $0xc] sm:$0xf]
    %v28 = vld [vmem:[%s1 + $0x10] sm:$0xf]
    %v29 = vld [vmem:[%s1 + $0x14] sm:$0xf]
    %v30 = vld [vmem:[%s1 + $0x18] sm:$0xf]
    %v31 = vld [vmem:[%s1 + $0x1c] sm:$0xf]
    %v32 = vld [vmem:[%s2] sm:$0x1]
    %v34 = vlaneseq
    %v35 = vshrl.u32 %v34, 7
    %v36 = vsub.s32 0, %v35
    %v37 = vrot.slane %v32, %v36
    %v41 = vunpack.c.l.b16 %v22
    %v42 = vunpack.c.l.b16 %v23
    %v43 = vpack.c.b16 %v42, %v41
    %v52 = vunpack.c.l.b16 %v24
    %v53 = vunpack.c.l.b16 %v25
    %v54 = vunpack.c.l.b16 %v26
    %v55 = vunpack.c.l.b16 %v27
    %v56 = vunpack.c.l.b16 %v28
    %v57 = vunpack.c.l.b16 %v29
    %v58 = vunpack.c.l.b16 %v30
    %v59 = vunpack.c.l.b16 %v31
    %v60 = vpack.c.b16 %v53, %v52
    %v61 = vpack.c.b16 %v55, %v54
    %v62 = vpack.c.b16 %v57, %v56
    %v63 = vpack.c.b16 %v59, %v58
    %vm68 = vcmask 523264
    %v70 = vsel %vm68, %v43, 0
    %72 = vmatprep.subr.bf16.mxu0 0
    %73 = vmatpush1.bf16.msra.mxu0 %v60
    %74 = vmatprep.subr.bf16.mxu0 0
    %75 = vmatpush1.bf16.msra.mxu0 %v61
    %76 = vmatprep.subr.bf16.mxu0 0
    %77 = vmatpush1.bf16.msra.mxu0 %v62
    %78 = vmatprep.subr.bf16.mxu0 0
    %79 = vmatpush1.bf16.msra.mxu0 %v63
    %80 = vmatprep.subr.bf16.mxu0 0
    %81 = vmatpush1.bf16.msra.mxu0 0
    %82 = vmatprep.subr.bf16.mxu0 0
    %83 = vmatpush1.bf16.msra.mxu0 0
    %84 = vmatprep.subr.bf16.mxu0 0
    %85 = vmatpush1.bf16.msra.mxu0 0
    %86 = vmatprep.subr.bf16.mxu0 0
    %87 = vmatpush1.bf16.msra.mxu0 0
    %88 = vmatprep.subr.bf16.mxu0 0
    %89 = vmatpush1.bf16.msra.mxu0 0
    %90 = vmatprep.subr.bf16.mxu0 0
    %91 = vmatpush1.bf16.msra.mxu0 0
    %92 = vmatprep.subr.bf16.mxu0 0
    %93 = vmatpush1.bf16.msra.mxu0 0
    %94 = vmatprep.subr.bf16.mxu0 0
    %95 = vmatpush1.bf16.msra.mxu0 0
    %96 = vmatprep.subr.bf16.mxu0 0
    %97 = vmatpush1.bf16.msra.mxu0 0
    %98 = vmatprep.subr.bf16.mxu0 0
    %99 = vmatpush1.bf16.msra.mxu0 0
    %100 = vmatprep.subr.bf16.mxu0 0
    %101 = vmatpush1.bf16.msra.mxu0 0
    %102 = vmatprep.subr.bf16.mxu0 0
    %103 = vmatpush1.bf16.msra.mxu0 0
    %104 = vmatprep.mubr.bf16.mxu0 0
    %105 = vmatmul.mubr.bf16.gmra.mrb[0].mxu0 %v70
    %v106 = vpop.f32.mrb[0].mxu0
    %v107 = vadd.f32 %v37, %v106
    %v108 = vpop.f32.mrb[0].mxu0
    %v109 = vpop.f32.mrb[0].mxu0
    %v110 = vadd.f32 %v37, %v109
    %v111 = vpop.f32.mrb[0].mxu0
    %112 = vdwg.mxu0
    %v113 = vpack.c.bf16 %v110, %v107
    %v114 = vld [vmem:[%s3] sm:$0xf]
    %v115 = vld [vmem:[%s3 + $0x4] sm:$0xf]
    %v116 = vld [vmem:[%s3 + $0x8] sm:$0xf]
    %v117 = vld [vmem:[%s3 + $0xc] sm:$0xf]
    %v118 = vld [vmem:[%s4] sm:$0x1]
    %v120 = vlaneseq
    %v121 = vshrl.u32 %v120, 7
    %v122 = vsub.s32 0, %v121
    %v123 = vrot.slane %v118, %v122
    %v129 = vunpack.c.l.b16 %v114
    %v130 = vunpack.c.l.b16 %v115
    %v131 = vunpack.c.l.b16 %v116
    %v132 = vunpack.c.l.b16 %v117
    %v133 = vpack.c.b16 %v130, %v129
    %v134 = vpack.c.b16 %v132, %v131
    %vm137 = vcmask 261120
    %v139 = vsel %vm137, %v113, 0
    %141 = vmatprep.subr.bf16.mxu0 0
    %142 = vmatpush1.bf16.msra.mxu0 %v133
    %143 = vmatprep.subr.bf16.mxu0 0
    %144 = vmatpush1.bf16.msra.mxu0 %v134
    %145 = vmatprep.subr.bf16.mxu0 0
    %146 = vmatpush1.bf16.msra.mxu0 0
    %147 = vmatprep.subr.bf16.mxu0 0
    %148 = vmatpush1.bf16.msra.mxu0 0
    %149 = vmatprep.subr.bf16.mxu0 0
    %150 = vmatpush1.bf16.msra.mxu0 0
    %151 = vmatprep.subr.bf16.mxu0 0
    %152 = vmatpush1.bf16.msra.mxu0 0
    %153 = vmatprep.subr.bf16.mxu0 0
    %154 = vmatpush1.bf16.msra.mxu0 0
    %155 = vmatprep.subr.bf16.mxu0 0
    %156 = vmatpush1.bf16.msra.mxu0 0
    %157 = vmatprep.subr.bf16.mxu0 0
    %158 = vmatpush1.bf16.msra.mxu0 0
    %159 = vmatprep.subr.bf16.mxu0 0
    %160 = vmatpush1.bf16.msra.mxu0 0
    %161 = vmatprep.subr.bf16.mxu0 0
    %162 = vmatpush1.bf16.msra.mxu0 0
    %163 = vmatprep.subr.bf16.mxu0 0
    %164 = vmatpush1.bf16.msra.mxu0 0
    %165 = vmatprep.subr.bf16.mxu0 0
    %166 = vmatpush1.bf16.msra.mxu0 0
    %167 = vmatprep.subr.bf16.mxu0 0
    %168 = vmatpush1.bf16.msra.mxu0 0
    %169 = vmatprep.subr.bf16.mxu0 0
    %170 = vmatpush1.bf16.msra.mxu0 0
    %171 = vmatprep.subr.bf16.mxu0 0
    %172 = vmatpush1.bf16.msra.mxu0 0
    %173 = vmatprep.mubr.bf16.mxu0 0
    %174 = vmatmul.mubr.bf16.gmra.mrb[0].mxu0 %v139
    %v175 = vpop.f32.mrb[0].mxu0
    %v176 = vadd.f32 %v123, %v175
    %v177 = vpop.f32.mrb[0].mxu0
    %v178 = vpop.f32.mrb[0].mxu0
    %v179 = vadd.f32 %v123, %v178
    %v180 = vpop.f32.mrb[0].mxu0
    %181 = vdwg.mxu0
    %182 = vst [vmem:[#allocation2] sm:$0xff] %v176
    %183 = vst [vmem:[#allocation2 + $0x8] sm:$0xff] %v179
    // Predicated region
    $region22: #{tpu_custom_call.1} parent=1 // pred_check
      _
    $region23: #{tpu_custom_call.1} parent=1 // pred_check_branch
      %185 = sbr.rel (0) target = $region25
    $region24: #{tpu_custom_call.1} parent=1 // pred_region
      %s187 = ssub.s32 256, 256
      %188 = vsyncadd [#allocation3], %s187
      %s189 = sshll.u32 [#allocation2], 4
      %s190 = int_to_ptr.vmem [resolvable:$true] %s189
      %195 = dma.vmem_to_hbm [thread:$0]  %s190, 256, %s5, [#allocation3], 128, 128, 8
    $region25: #{tpu_custom_call.1} parent=1 // pred_fallthru
      _
    // Predicated region
    $region26: #{tpu_custom_call.1} parent=1 // pred_check
      _
    $region27: #{tpu_custom_call.1} parent=1 // pred_check_branch
      %197 = sbr.rel (0) target = $region29
    $region28: #{tpu_custom_call.1} parent=1 // pred_region
      %198 = dma.done [#allocation3], 256
    $region29: #{tpu_custom_call.1} parent=1 // pred_fallthru
      _
    %199 = vsyncpa [#allocation3], 1

</llo_original>
